<compile_context>
chip_gen: v5e
topology: v5e:2x2
jax: 0.10.0
libtpu: 0.0.40
codegen_flags: <defaults>
</compile_context>

<pallas_src>
import functools

import jax
import jax.numpy as jnp
import numpy as np
from jax.experimental import pallas as pl
from jax.experimental.pallas import tpu as pltpu

KSIZE = 3
PAD = 1


def _concat_conv2d_kernel(x_ref, w_ref, b_ref, o_ref, patch_ref, *,
                          n_img, cp, wp, m):
    # x_ref    : (N, cp, lp)    row-flattened, zero-padded images (channels first,
    #                           channels zero-padded to cp = multiple of 8, row
    #                           width wp chosen so m = H*wp is a 128 multiple)
    # w_ref    : (Cout, 9*cp)   weights with (kh, kw, c) folded into K
    # b_ref    : (Cout, 1)      bias
    # o_ref    : (N, Cout, m)   flat outputs (junk columns sliced off outside)
    # patch_ref: (9*cp, N*m)    VMEM im2col-lite scratch, batch folded into lanes
    for n in range(n_img):
        xp = x_ref[n]                       # load the padded plane ONCE per image
        for kh in range(KSIZE):
            for kw in range(KSIZE):
                tap = kh * KSIZE + kw
                off = kh * wp + kw
                # Store is fully aligned: tap*cp | 8 sublanes, n*m and m | 128 lanes.
                patch_ref[tap * cp:(tap + 1) * cp,
                          n * m:(n + 1) * m] = xp[:, off:off + m]

    # One MXU contraction for the whole batch: (Cout, 9*cp) @ (9*cp, N*m), f32 acc.
    acc = jnp.dot(w_ref[...], patch_ref[...],
                  preferred_element_type=jnp.float32)
    acc = acc + b_ref[...]                  # bias broadcast

    for n in range(n_img):
        # Lane slice starts at n*m (multiple of 128) -> aligned, unmasked stores.
        o_ref[n] = acc[:, n * m:(n + 1) * m].astype(o_ref.dtype)


def concat_conv2d(t, x, weight, bias):
    """Forward of ConcatConv2d (ksize=3, stride=1, padding=1).

    t      : scalar (float)
    x      : (N, C, H, W)  NCHW, float32
    weight : (Cout, C+1, 3, 3)  PyTorch OIHW layout
    bias   : (Cout,)
    returns: (N, Cout, H, W)  NCHW
    """
    N, C, H, W = x.shape
    cout = weight.shape[0]
    cin1 = C + 1
    cp = ((cin1 + 7) // 8) * 8          # channels padded to a sublane multiple

    # Flat row width: >= W + 2*PAD, rounded up so H*wp is a multiple of 128
    # (lane-dense stores).  Extra columns are junk and sliced off at the end.
    wp = W + 2 * PAD
    while (H * wp) % 128 != 0:
        wp += 1
    m = H * wp                          # flat output length per image
    k = KSIZE * KSIZE * cp              # folded contraction depth
    lp = (H + 2 * PAD + 1) * wp         # +1 slack row keeps every tap slice in-bounds

    # t-channel concat + channel/spatial zero-pad, kept in NCHW (no transposes);
    # XLA fuses these into a single producer pass for the flattened padded input.
    tt = jnp.full((N, 1, H, W), t, dtype=x.dtype)
    ttx = jnp.concatenate([tt, x], axis=1)                          # (N, cin1, H, W)
    xpad = jnp.pad(ttx, ((0, 0), (0, cp - cin1),
                         (PAD, PAD + 1), (PAD, wp - W - PAD)))      # (N, cp, H+3, wp)
    xflat = xpad.reshape(N, cp, lp)

    # Weights: OIHW -> (Cout, kh, kw, cin) -> zero-pad cin to cp -> (Cout, 9*cp),
    # matching the patch row order (kh, kw, c).
    w_t = jnp.transpose(weight, (0, 2, 3, 1))
    w_t = jnp.pad(w_t, ((0, 0), (0, 0), (0, 0), (0, cp - cin1)))
    w_mat = w_t.reshape(cout, k)
    b2 = bias.reshape(cout, 1)

    kernel = functools.partial(_concat_conv2d_kernel,
                               n_img=N, cp=cp, wp=wp, m=m)
    itemsize = x.dtype.itemsize
    cost = pl.CostEstimate(
        flops=2 * cout * k * N * m,
        transcendentals=0,
        bytes_accessed=(xflat.size + w_mat.size + b2.size + N * cout * m) * itemsize,
    )

    out_flat = pl.pallas_call(
        kernel,
        out_shape=jax.ShapeDtypeStruct((N, cout, m), x.dtype),
        grid_spec=pltpu.PrefetchScalarGridSpec(
            num_scalar_prefetch=0,
            grid=(1,),                                   # whole batch in one step
            in_specs=[
                pl.BlockSpec((N, cp, lp), lambda i: (0, 0, 0)),
                pl.BlockSpec((cout, k), lambda i: (0, 0)),
                pl.BlockSpec((cout, 1), lambda i: (0, 0)),
            ],
            out_specs=pl.BlockSpec((N, cout, m), lambda i: (0, 0, 0)),
            scratch_shapes=[pltpu.VMEM((k, N * m), x.dtype)],
        ),
        compiler_params=pltpu.CompilerParams(
            dimension_semantics=("arbitrary",)),
        cost_estimate=cost,
    )(xflat, w_mat, b2)

    # Already NCHW: free reshape, then drop the junk columns of each row.
    out = out_flat.reshape(N, cout, H, wp)[:, :, :, :W]
    return out


if __name__ == "__main__":
    key = jax.random.PRNGKey(0)
    dim_in, dim_out = 4, 8
    N, H, W = 2, 16, 16

    k1, k2, k3 = jax.random.split(key, 3)
    x = jax.random.normal(k1, (N, dim_in, H, W), dtype=jnp.float32)
    t = jnp.float32(0.5)

    # Deterministic parameter init (Conv2d-style uniform bounds).
    fan_in = (dim_in + 1) * KSIZE * KSIZE
    bound = 1.0 / np.sqrt(fan_in)
    weight = jax.random.uniform(k2, (dim_out, dim_in + 1, KSIZE, KSIZE),
                                jnp.float32, -bound, bound)
    bias = jax.random.uniform(k3, (dim_out,), jnp.float32, -bound, bound)

    out = concat_conv2d(t, x, weight, bias)
    out = jax.block_until_ready(out)

    # Reference check against XLA's conv (same semantics as nn.Conv2d).
    tt = jnp.full((N, 1, H, W), t, jnp.float32)
    ttx = jnp.concatenate([tt, x], axis=1)
    ref = jax.lax.conv_general_dilated(
        ttx, weight, window_strides=(1, 1),
        padding=((PAD, PAD), (PAD, PAD)),
        dimension_numbers=("NCHW", "OIHW", "NCHW"),
    ) + bias[None, :, None, None]

    assert out.shape == (N, dim_out, H, W), out.shape
    assert np.allclose(np.asarray(out), np.asarray(ref), atol=1e-4, rtol=1e-4)
    print("KERNEL_OK")
</pallas_src>

<mosaic_0001>
module attributes {stable_mosaic.version = 11 : i64} {
  func.func @_concat_conv2d_kernel(%arg0: i32, %arg1: memref<2x8x456xf32, #tpu.memory_space<vmem>>, %arg2: memref<8x72xf32, #tpu.memory_space<vmem>>, %arg3: memref<8x1xf32, #tpu.memory_space<vmem>>, %arg4: memref<2x8x384xf32, #tpu.memory_space<vmem>>, %arg5: memref<72x768xf32, #tpu.memory_space<vmem>>) attributes {dimension_semantics = [#tpu.dimension_semantics<arbitrary>], iteration_bounds = array<i64: 1>, scalar_prefetch = 0 : i64, scratch_operands = 1 : i64, tpu.core_type = #tpu.core_type<tc>, window_params = [{pipeline_mode = #tpu.pipeline_mode<synchronous>, transform_indices = @transform_0, window_bounds = array<i64: 2, 8, 456>}, {pipeline_mode = #tpu.pipeline_mode<synchronous>, transform_indices = @transform_1, window_bounds = array<i64: 8, 72>}, {pipeline_mode = #tpu.pipeline_mode<synchronous>, transform_indices = @transform_2, window_bounds = array<i64: 8, 1>}, {pipeline_mode = #tpu.pipeline_mode<synchronous>, transform_indices = @transform_3, window_bounds = array<i64: 2, 8, 384>}]} {
    %c0 = arith.constant 0 : index
    %c0_0 = arith.constant 0 : index
    %c0_1 = arith.constant 0 : index
    %0 = vector.load %arg1[%c0, %c0_0, %c0_1] : memref<2x8x456xf32, #tpu.memory_space<vmem>>, vector<1x8x456xf32>
    %1 = vector.shape_cast %0 : vector<1x8x456xf32> to vector<8x456xf32>
    %2 = vector.extract_strided_slice %1 {offsets = [0, 0], sizes = [8, 384], strides = [1, 1]} : vector<8x456xf32> to vector<8x384xf32>
    %c0_2 = arith.constant 0 : index
    %c0_3 = arith.constant 0 : index
    %3 = vector.load %arg5[%c0_2, %c0_3] : memref<72x768xf32, #tpu.memory_space<vmem>>, vector<8x384xf32>
    tpu.vector_store %arg5[%c0_2, %c0_3], %2 {strides = array<i32>} : memref<72x768xf32, #tpu.memory_space<vmem>>, vector<8x384xf32>,
    %4 = vector.extract_strided_slice %1 {offsets = [0, 1], sizes = [8, 384], strides = [1, 1]} : vector<8x456xf32> to vector<8x384xf32>
    %c8 = arith.constant 8 : index
    %c0_4 = arith.constant 0 : index
    %5 = vector.load %arg5[%c8, %c0_4] : memref<72x768xf32, #tpu.memory_space<vmem>>, vector<8x384xf32>
    tpu.vector_store %arg5[%c8, %c0_4], %4 {strides = array<i32>} : memref<72x768xf32, #tpu.memory_space<vmem>>, vector<8x384xf32>,
    %6 = vector.extract_strided_slice %1 {offsets = [0, 2], sizes = [8, 384], strides = [1, 1]} : vector<8x456xf32> to vector<8x384xf32>
    %c16 = arith.constant 16 : index
    %c0_5 = arith.constant 0 : index
    %7 = vector.load %arg5[%c16, %c0_5] : memref<72x768xf32, #tpu.memory_space<vmem>>, vector<8x384xf32>
    tpu.vector_store %arg5[%c16, %c0_5], %6 {strides = array<i32>} : memref<72x768xf32, #tpu.memory_space<vmem>>, vector<8x384xf32>,
    %8 = vector.extract_strided_slice %1 {offsets = [0, 24], sizes = [8, 384], strides = [1, 1]} : vector<8x456xf32> to vector<8x384xf32>
    %c24 = arith.constant 24 : index
    %c0_6 = arith.constant 0 : index
    %9 = vector.load %arg5[%c24, %c0_6] : memref<72x768xf32, #tpu.memory_space<vmem>>, vector<8x384xf32>
    tpu.vector_store %arg5[%c24, %c0_6], %8 {strides = array<i32>} : memref<72x768xf32, #tpu.memory_space<vmem>>, vector<8x384xf32>,
    %10 = vector.extract_strided_slice %1 {offsets = [0, 25], sizes = [8, 384], strides = [1, 1]} : vector<8x456xf32> to vector<8x384xf32>
    %c32 = arith.constant 32 : index
    %c0_7 = arith.constant 0 : index
    %11 = vector.load %arg5[%c32, %c0_7] : memref<72x768xf32, #tpu.memory_space<vmem>>, vector<8x384xf32>
    tpu.vector_store %arg5[%c32, %c0_7], %10 {strides = array<i32>} : memref<72x768xf32, #tpu.memory_space<vmem>>, vector<8x384xf32>,
    %12 = vector.extract_strided_slice %1 {offsets = [0, 26], sizes = [8, 384], strides = [1, 1]} : vector<8x456xf32> to vector<8x384xf32>
    %c40 = arith.constant 40 : index
    %c0_8 = arith.constant 0 : index
    %13 = vector.load %arg5[%c40, %c0_8] : memref<72x768xf32, #tpu.memory_space<vmem>>, vector<8x384xf32>
    tpu.vector_store %arg5[%c40, %c0_8], %12 {strides = array<i32>} : memref<72x768xf32, #tpu.memory_space<vmem>>, vector<8x384xf32>,
    %14 = vector.extract_strided_slice %1 {offsets = [0, 48], sizes = [8, 384], strides = [1, 1]} : vector<8x456xf32> to vector<8x384xf32>
    %c48 = arith.constant 48 : index
    %c0_9 = arith.constant 0 : index
    %15 = vector.load %arg5[%c48, %c0_9] : memref<72x768xf32, #tpu.memory_space<vmem>>, vector<8x384xf32>
    tpu.vector_store %arg5[%c48, %c0_9], %14 {strides = array<i32>} : memref<72x768xf32, #tpu.memory_space<vmem>>, vector<8x384xf32>,
    %16 = vector.extract_strided_slice %1 {offsets = [0, 49], sizes = [8, 384], strides = [1, 1]} : vector<8x456xf32> to vector<8x384xf32>
    %c56 = arith.constant 56 : index
    %c0_10 = arith.constant 0 : index
    %17 = vector.load %arg5[%c56, %c0_10] : memref<72x768xf32, #tpu.memory_space<vmem>>, vector<8x384xf32>
    tpu.vector_store %arg5[%c56, %c0_10], %16 {strides = array<i32>} : memref<72x768xf32, #tpu.memory_space<vmem>>, vector<8x384xf32>,
    %18 = vector.extract_strided_slice %1 {offsets = [0, 50], sizes = [8, 384], strides = [1, 1]} : vector<8x456xf32> to vector<8x384xf32>
    %c64 = arith.constant 64 : index
    %c0_11 = arith.constant 0 : index
    %19 = vector.load %arg5[%c64, %c0_11] : memref<72x768xf32, #tpu.memory_space<vmem>>, vector<8x384xf32>
    tpu.vector_store %arg5[%c64, %c0_11], %18 {strides = array<i32>} : memref<72x768xf32, #tpu.memory_space<vmem>>, vector<8x384xf32>,
    %c1 = arith.constant 1 : index
    %c0_12 = arith.constant 0 : index
    %c0_13 = arith.constant 0 : index
    %20 = vector.load %arg1[%c1, %c0_12, %c0_13] : memref<2x8x456xf32, #tpu.memory_space<vmem>>, vector<1x8x456xf32>
    %21 = vector.shape_cast %20 : vector<1x8x456xf32> to vector<8x456xf32>
    %22 = vector.extract_strided_slice %21 {offsets = [0, 0], sizes = [8, 384], strides = [1, 1]} : vector<8x456xf32> to vector<8x384xf32>
    %c0_14 = arith.constant 0 : index
    %c384 = arith.constant 384 : index
    %23 = vector.load %arg5[%c0_14, %c384] : memref<72x768xf32, #tpu.memory_space<vmem>>, vector<8x384xf32>
    tpu.vector_store %arg5[%c0_14, %c384], %22 {strides = array<i32>} : memref<72x768xf32, #tpu.memory_space<vmem>>, vector<8x384xf32>,
    %24 = vector.extract_strided_slice %21 {offsets = [0, 1], sizes = [8, 384], strides = [1, 1]} : vector<8x456xf32> to vector<8x384xf32>
    %c8_15 = arith.constant 8 : index
    %c384_16 = arith.constant 384 : index
    %25 = vector.load %arg5[%c8_15, %c384_16] : memref<72x768xf32, #tpu.memory_space<vmem>>, vector<8x384xf32>
    tpu.vector_store %arg5[%c8_15, %c384_16], %24 {strides = array<i32>} : memref<72x768xf32, #tpu.memory_space<vmem>>, vector<8x384xf32>,
    %26 = vector.extract_strided_slice %21 {offsets = [0, 2], sizes = [8, 384], strides = [1, 1]} : vector<8x456xf32> to vector<8x384xf32>
    %c16_17 = arith.constant 16 : index
    %c384_18 = arith.constant 384 : index
    %27 = vector.load %arg5[%c16_17, %c384_18] : memref<72x768xf32, #tpu.memory_space<vmem>>, vector<8x384xf32>
    tpu.vector_store %arg5[%c16_17, %c384_18], %26 {strides = array<i32>} : memref<72x768xf32, #tpu.memory_space<vmem>>, vector<8x384xf32>,
    %28 = vector.extract_strided_slice %21 {offsets = [0, 24], sizes = [8, 384], strides = [1, 1]} : vector<8x456xf32> to vector<8x384xf32>
    %c24_19 = arith.constant 24 : index
    %c384_20 = arith.constant 384 : index
    %29 = vector.load %arg5[%c24_19, %c384_20] : memref<72x768xf32, #tpu.memory_space<vmem>>, vector<8x384xf32>
    tpu.vector_store %arg5[%c24_19, %c384_20], %28 {strides = array<i32>} : memref<72x768xf32, #tpu.memory_space<vmem>>, vector<8x384xf32>,
    %30 = vector.extract_strided_slice %21 {offsets = [0, 25], sizes = [8, 384], strides = [1, 1]} : vector<8x456xf32> to vector<8x384xf32>
    %c32_21 = arith.constant 32 : index
    %c384_22 = arith.constant 384 : index
    %31 = vector.load %arg5[%c32_21, %c384_22] : memref<72x768xf32, #tpu.memory_space<vmem>>, vector<8x384xf32>
    tpu.vector_store %arg5[%c32_21, %c384_22], %30 {strides = array<i32>} : memref<72x768xf32, #tpu.memory_space<vmem>>, vector<8x384xf32>,
    %32 = vector.extract_strided_slice %21 {offsets = [0, 26], sizes = [8, 384], strides = [1, 1]} : vector<8x456xf32> to vector<8x384xf32>
    %c40_23 = arith.constant 40 : index
    %c384_24 = arith.constant 384 : index
    %33 = vector.load %arg5[%c40_23, %c384_24] : memref<72x768xf32, #tpu.memory_space<vmem>>, vector<8x384xf32>
    tpu.vector_store %arg5[%c40_23, %c384_24], %32 {strides = array<i32>} : memref<72x768xf32, #tpu.memory_space<vmem>>, vector<8x384xf32>,
    %34 = vector.extract_strided_slice %21 {offsets = [0, 48], sizes = [8, 384], strides = [1, 1]} : vector<8x456xf32> to vector<8x384xf32>
    %c48_25 = arith.constant 48 : index
    %c384_26 = arith.constant 384 : index
    %35 = vector.load %arg5[%c48_25, %c384_26] : memref<72x768xf32, #tpu.memory_space<vmem>>, vector<8x384xf32>
    tpu.vector_store %arg5[%c48_25, %c384_26], %34 {strides = array<i32>} : memref<72x768xf32, #tpu.memory_space<vmem>>, vector<8x384xf32>,
    %36 = vector.extract_strided_slice %21 {offsets = [0, 49], sizes = [8, 384], strides = [1, 1]} : vector<8x456xf32> to vector<8x384xf32>
    %c56_27 = arith.constant 56 : index
    %c384_28 = arith.constant 384 : index
    %37 = vector.load %arg5[%c56_27, %c384_28] : memref<72x768xf32, #tpu.memory_space<vmem>>, vector<8x384xf32>
    tpu.vector_store %arg5[%c56_27, %c384_28], %36 {strides = array<i32>} : memref<72x768xf32, #tpu.memory_space<vmem>>, vector<8x384xf32>,
    %38 = vector.extract_strided_slice %21 {offsets = [0, 50], sizes = [8, 384], strides = [1, 1]} : vector<8x456xf32> to vector<8x384xf32>
    %c64_29 = arith.constant 64 : index
    %c384_30 = arith.constant 384 : index
    %39 = vector.load %arg5[%c64_29, %c384_30] : memref<72x768xf32, #tpu.memory_space<vmem>>, vector<8x384xf32>
    tpu.vector_store %arg5[%c64_29, %c384_30], %38 {strides = array<i32>} : memref<72x768xf32, #tpu.memory_space<vmem>>, vector<8x384xf32>,
    %c0_31 = arith.constant 0 : index
    %c0_32 = arith.constant 0 : index
    %40 = vector.load %arg2[%c0_31, %c0_32] : memref<8x72xf32, #tpu.memory_space<vmem>>, vector<8x72xf32>
    %c0_33 = arith.constant 0 : index
    %c0_34 = arith.constant 0 : index
    %41 = vector.load %arg5[%c0_33, %c0_34] : memref<72x768xf32, #tpu.memory_space<vmem>>, vector<72x768xf32>
    %cst = arith.constant dense<0.000000e+00> : vector<8x768xf32>
    %42 = tpu.matmul %40, %41, %cst {dimension_numbers = #tpu.dot_dimension_numbers<[1], [0], [0], [1], [0, 0, 1, 1], [], []>} : vector<8x72xf32>, vector<72x768xf32>, vector<8x768xf32> -> vector<8x768xf32>
    %c0_35 = arith.constant 0 : index
    %c0_36 = arith.constant 0 : index
    %43 = vector.load %arg3[%c0_35, %c0_36] : memref<8x1xf32, #tpu.memory_space<vmem>>, vector<8x1xf32>
    %44 = vector.broadcast %43 : vector<8x1xf32> to vector<8x768xf32>
    %45 = arith.addf %42, %44 : vector<8x768xf32>
    %46 = vector.extract_strided_slice %45 {offsets = [0, 0], sizes = [8, 384], strides = [1, 1]} : vector<8x768xf32> to vector<8x384xf32>
    %c0_37 = arith.constant 0 : index
    %c0_38 = arith.constant 0 : index
    %c0_39 = arith.constant 0 : index
    %47 = vector.load %arg4[%c0_37, %c0_38, %c0_39] : memref<2x8x384xf32, #tpu.memory_space<vmem>>, vector<1x8x384xf32>
    %48 = vector.shape_cast %47 : vector<1x8x384xf32> to vector<8x384xf32>
    %49 = vector.shape_cast %46 : vector<8x384xf32> to vector<1x8x384xf32>
    tpu.vector_store %arg4[%c0_37, %c0_38, %c0_39], %49 {strides = array<i32>} : memref<2x8x384xf32, #tpu.memory_space<vmem>>, vector<1x8x384xf32>,
    %50 = vector.extract_strided_slice %45 {offsets = [0, 384], sizes = [8, 384], strides = [1, 1]} : vector<8x768xf32> to vector<8x384xf32>
    %c1_40 = arith.constant 1 : index
    %c0_41 = arith.constant 0 : index
    %c0_42 = arith.constant 0 : index
    %51 = vector.load %arg4[%c1_40, %c0_41, %c0_42] : memref<2x8x384xf32, #tpu.memory_space<vmem>>, vector<1x8x384xf32>
    %52 = vector.shape_cast %51 : vector<1x8x384xf32> to vector<8x384xf32>
    %53 = vector.shape_cast %50 : vector<8x384xf32> to vector<1x8x384xf32>
    tpu.vector_store %arg4[%c1_40, %c0_41, %c0_42], %53 {strides = array<i32>} : memref<2x8x384xf32, #tpu.memory_space<vmem>>, vector<1x8x384xf32>,
    return
  }
  func.func @transform_0(%arg0: i32) -> (i32, i32, i32) {
    %c0_i32 = arith.constant 0 : i32
    %c0_i32_0 = arith.constant 0 : i32
    %c0_i32_1 = arith.constant 0 : i32
    %c0_i32_2 = arith.constant 0 : i32
    return %c0_i32, %c0_i32_0, %c0_i32_1 : i32, i32, i32
  }
  func.func @transform_1(%arg0: i32) -> (i32, i32) {
    %c0_i32 = arith.constant 0 : i32
    %c0_i32_0 = arith.constant 0 : i32
    %c0_i32_1 = arith.constant 0 : i32
    return %c0_i32, %c0_i32_0 : i32, i32
  }
  func.func @transform_2(%arg0: i32) -> (i32, i32) {
    %c0_i32 = arith.constant 0 : i32
    %c0_i32_0 = arith.constant 0 : i32
    %c0_i32_1 = arith.constant 0 : i32
    return %c0_i32, %c0_i32_0 : i32, i32
  }
  func.func @transform_3(%arg0: i32) -> (i32, i32, i32) {
    %c0_i32 = arith.constant 0 : i32
    %c0_i32_0 = arith.constant 0 : i32
    %c0_i32_1 = arith.constant 0 : i32
    %c0_i32_2 = arith.constant 0 : i32
    return %c0_i32, %c0_i32_0, %c0_i32_1 : i32, i32, i32
  }
}

</mosaic_0001>

<llo_original>
// kernel: tpu_custom_call.1
$region0: #{tpu_custom_call.1}
  #allocation0 [shape = 'u32[]', space=smem, size = 0x4, offset = 0x4, fixed_abs, tag = 'smem constant byte address 0x4 - core index']
  #allocation1 [shape = 'u32[72,128]{1,0:T(1,128)}', space=vmem, size = 0x9000, scoped, tag = 'internal scratch']
  #allocation2 [shape = 'f32[72,768]{1,0:T(8,128)}', space=vmem, size = 0x36000, scoped, tag = 'scratch operand']
  %s0 = inlined_call_operand.hbm [shape: f32[2,8,456], index: 0, kind: input, shape index: {}]
  %s1 = inlined_call_operand.vmem [shape: f32[8,72], index: 1, kind: input, shape index: {}]
  %s2 = inlined_call_operand.vmem [shape: f32[8,1], index: 2, kind: input, shape index: {}]
  %s3 = inlined_call_operand.hbm [shape: f32[2,8,384], index: 3, kind: output, shape index: {}]
  %s4 = sld [smem:[#allocation0]]
  $region26: #{tpu_custom_call.1} parent=0
    _
  %s6 = ssub.s32 1, %s4
  %s7 = scalar_select 0, %s6, %s4
  $region1: #{tpu_custom_call.1} parent=0
    #allocation3 [shape = 'u8[32768]{0}', space=vmem, size = 0x8000, scoped, tag = 'input window, operand 0, single buffered']
    #allocation4 [shape = 's32[1]{0}', space=sflag, size = 0x4, scoped, tag = 'scoped memory for tpu_custom_call.1']
    #allocation5 [shape = 's32[1]{0}', space=sflag, size = 0x4, scoped, tag = 'scoped memory for tpu_custom_call.1']
    #allocation6 [shape = 'u8[24576]{0}', space=vmem, size = 0x6000, scoped, tag = 'output window, operand 0, single buffered']
    %8 = vsyncpa [#allocation4], 0
    %9 = vsyncpa [#allocation5], 0
    // Predicated region
    $region2: #{tpu_custom_call.1} parent=1 // pred_check
      _
    $region3: #{tpu_custom_call.1} parent=1 // pred_check_branch
      %11 = sbr.rel (0) target = $region5
    $region4: #{tpu_custom_call.1} parent=1 // pred_region
      %13 = vsyncadd [#allocation4], 0
      %s14 = sshll.u32 %s0, 4
      %s15 = int_to_ptr.hbm [resolvable:$true] %s14
      %s16 = sshll.u32 [#allocation3], 4
      %s17 = int_to_ptr.vmem [resolvable:$true] %s16
      %22 = dma.hbm_to_vmem [thread:$0]  %s15, 1024, %s17, [#allocation4], 512, 512, 32
    $region5: #{tpu_custom_call.1} parent=1 // pred_fallthru
      _
    // Predicated region
    $region6: #{tpu_custom_call.1} parent=1 // pred_check
      _
    $region7: #{tpu_custom_call.1} parent=1 // pred_check_branch
      %24 = sbr.rel (0) target = $region9
    $region8: #{tpu_custom_call.1} parent=1 // pred_region
      _
    $region9: #{tpu_custom_call.1} parent=1 // pred_fallthru
      _
    // Predicated region
    $region10: #{tpu_custom_call.1} parent=1 // pred_check
      _
    $region11: #{tpu_custom_call.1} parent=1 // pred_check_branch
      %26 = sbr.rel (0) target = $region13
    $region12: #{tpu_custom_call.1} parent=1 // pred_region
      _
    $region13: #{tpu_custom_call.1} parent=1 // pred_fallthru
      _
    // Predicated region
    $region14: #{tpu_custom_call.1} parent=1 // pred_check
      _
    $region15: #{tpu_custom_call.1} parent=1 // pred_check_branch
      %28 = sbr.rel (0) target = $region17
    $region16: #{tpu_custom_call.1} parent=1 // pred_region
      %30 = dma.done [#allocation4], 1024
    $region17: #{tpu_custom_call.1} parent=1 // pred_fallthru
      _
    %v31 = vld [vmem:[#allocation3] sm:$0xff]
    %v32 = vld [vmem:[#allocation3 + $0x8] sm:$0xff]
    %v33 = vld [vmem:[#allocation3 + $0x10] sm:$0xff]
    %v34 = vld [vmem:[#allocation3 + $0x18] sm:$0xff]
    %35 = vst [vmem:[#allocation2] sm:$0xff] %v31
    %36 = vst [vmem:[#allocation2 + $0x8] sm:$0xff] %v32
    %37 = vst [vmem:[#allocation2 + $0x10] sm:$0xff] %v33
    %42 = vrot.lane.b32.xlu0 %v31, 127
    %v43 = vpop.permute.xlu0 %42
    %44 = vrot.lane.b32.xlu0 %v32, 127
    %v45 = vpop.permute.xlu0 %44
    %46 = vrot.lane.b32.xlu0 %v33, 127
    %v47 = vpop.permute.xlu0 %46
    %48 = vrot.lane.b32.xlu0 %v34, 127
    %v49 = vpop.permute.xlu0 %48
    %vm50 = vcmask 1039360
    %v51 = vsel %vm50, %v43, %v45
    %v52 = vsel %vm50, %v45, %v47
    %v53 = vsel %vm50, %v47, %v49
    %57 = vst [vmem:[#allocation2 + $0x30] sm:$0xff] %v51
    %58 = vst [vmem:[#allocation2 + $0x38] sm:$0xff] %v52
    %59 = vst [vmem:[#allocation2 + $0x40] sm:$0xff] %v53
    %60 = vrot.lane.b32.xlu0 %v31, 126
    %v61 = vpop.permute.xlu0 %60
    %62 = vrot.lane.b32.xlu0 %v32, 126
    %v63 = vpop.permute.xlu0 %62
    %64 = vrot.lane.b32.xlu0 %v33, 126
    %v65 = vpop.permute.xlu0 %64
    %66 = vrot.lane.b32.xlu0 %v34, 126
    %v67 = vpop.permute.xlu0 %66
    %vm68 = vcmask 1031168
    %v69 = vsel %vm68, %v61, %v63
    %v70 = vsel %vm68, %v63, %v65
    %v71 = vsel %vm68, %v65, %v67
    %75 = vst [vmem:[#allocation2 + $0x60] sm:$0xff] %v69
    %76 = vst [vmem:[#allocation2 + $0x68] sm:$0xff] %v70
    %77 = vst [vmem:[#allocation2 + $0x70] sm:$0xff] %v71
    %78 = vrot.lane.b32.xlu0 %v31, 104
    %v79 = vpop.permute.xlu0 %78
    %80 = vrot.lane.b32.xlu0 %v32, 104
    %v81 = vpop.permute.xlu0 %80
    %82 = vrot.lane.b32.xlu0 %v33, 104
    %v83 = vpop.permute.xlu0 %82
    %84 = vrot.lane.b32.xlu0 %v34, 104
    %v85 = vpop.permute.xlu0 %84
    %vm86 = vcmask 850944
    %v87 = vsel %vm86, %v79, %v81
    %v88 = vsel %vm86, %v81, %v83
    %v89 = vsel %vm86, %v83, %v85
    %93 = vst [vmem:[#allocation2 + $0x90] sm:$0xff] %v87
    %94 = vst [vmem:[#allocation2 + $0x98] sm:$0xff] %v88
    %95 = vst [vmem:[#allocation2 + $0xa0] sm:$0xff] %v89
    %96 = vrot.lane.b32.xlu0 %v31, 103
    %v97 = vpop.permute.xlu0 %96
    %98 = vrot.lane.b32.xlu0 %v32, 103
    %v99 = vpop.permute.xlu0 %98
    %100 = vrot.lane.b32.xlu0 %v33, 103
    %v101 = vpop.permute.xlu0 %100
    %102 = vrot.lane.b32.xlu0 %v34, 103
    %v103 = vpop.permute.xlu0 %102
    %vm104 = vcmask 842752
    %v105 = vsel %vm104, %v97, %v99
    %v106 = vsel %vm104, %v99, %v101
    %v107 = vsel %vm104, %v101, %v103
    %111 = vst [vmem:[#allocation2 + $0xc0] sm:$0xff] %v105
    %112 = vst [vmem:[#allocation2 + $0xc8] sm:$0xff] %v106
    %113 = vst [vmem:[#allocation2 + $0xd0] sm:$0xff] %v107
    %114 = vrot.lane.b32.xlu0 %v31, 102
    %v115 = vpop.permute.xlu0 %114
    %116 = vrot.lane.b32.xlu0 %v32, 102
    %v117 = vpop.permute.xlu0 %116
    %118 = vrot.lane.b32.xlu0 %v33, 102
    %v119 = vpop.permute.xlu0 %118
    %120 = vrot.lane.b32.xlu0 %v34, 102
    %v121 = vpop.permute.xlu0 %120
    %vm122 = vcmask 834560
    %v123 = vsel %vm122, %v115, %v117
    %v124 = vsel %vm122, %v117, %v119
    %v125 = vsel %vm122, %v119, %v121
    %129 = vst [vmem:[#allocation2 + $0xf0] sm:$0xff] %v123
    %130 = vst [vmem:[#allocation2 + $0xf8] sm:$0xff] %v124
    %131 = vst [vmem:[#allocation2 + $0x100] sm:$0xff] %v125
    %132 = vrot.lane.b32.xlu0 %v31, 80
    %v133 = vpop.permute.xlu0 %132
    %134 = vrot.lane.b32.xlu0 %v32, 80
    %v135 = vpop.permute.xlu0 %134
    %136 = vrot.lane.b32.xlu0 %v33, 80
    %v137 = vpop.permute.xlu0 %136
    %138 = vrot.lane.b32.xlu0 %v34, 80
    %v139 = vpop.permute.xlu0 %138
    %vm140 = vcmask 654336
    %v141 = vsel %vm140, %v133, %v135
    %v142 = vsel %vm140, %v135, %v137
    %v143 = vsel %vm140, %v137, %v139
    %147 = vst [vmem:[#allocation2 + $0x120] sm:$0xff] %v141
    %148 = vst [vmem:[#allocation2 + $0x128] sm:$0xff] %v142
    %149 = vst [vmem:[#allocation2 + $0x130] sm:$0xff] %v143
    %150 = vrot.lane.b32.xlu0 %v31, 79
    %v151 = vpop.permute.xlu0 %150
    %152 = vrot.lane.b32.xlu0 %v32, 79
    %v153 = vpop.permute.xlu0 %152
    %154 = vrot.lane.b32.xlu0 %v33, 79
    %v155 = vpop.permute.xlu0 %154
    %156 = vrot.lane.b32.xlu0 %v34, 79
    %v157 = vpop.permute.xlu0 %156
    %vm158 = vcmask 646144
    %v159 = vsel %vm158, %v151, %v153
    %v160 = vsel %vm158, %v153, %v155
    %v161 = vsel %vm158, %v155, %v157
    %165 = vst [vmem:[#allocation2 + $0x150] sm:$0xff] %v159
    %166 = vst [vmem:[#allocation2 + $0x158] sm:$0xff] %v160
    %167 = vst [vmem:[#allocation2 + $0x160] sm:$0xff] %v161
    %168 = vrot.lane.b32.xlu0 %v31, 78
    %v169 = vpop.permute.xlu0 %168
    %170 = vrot.lane.b32.xlu0 %v32, 78
    %v171 = vpop.permute.xlu0 %170
    %172 = vrot.lane.b32.xlu0 %v33, 78
    %v173 = vpop.permute.xlu0 %172
    %174 = vrot.lane.b32.xlu0 %v34, 78
    %v175 = vpop.permute.xlu0 %174
    %vm176 = vcmask 637952
    %v177 = vsel %vm176, %v169, %v171
    %v178 = vsel %vm176, %v171, %v173
    %v179 = vsel %vm176, %v173, %v175
    %183 = vst [vmem:[#allocation2 + $0x180] sm:$0xff] %v177
    %184 = vst [vmem:[#allocation2 + $0x188] sm:$0xff] %v178
    %185 = vst [vmem:[#allocation2 + $0x190] sm:$0xff] %v179
    %s186 = scalar_lea.vmem [#allocation3], 32
    %v187 = vld [vmem:[%s186] sm:$0xff]
    %v188 = vld [vmem:[%s186 + $0x8] sm:$0xff]
    %v189 = vld [vmem:[%s186 + $0x10] sm:$0xff]
    %v190 = vld [vmem:[%s186 + $0x18] sm:$0xff]
    %191 = vst [vmem:[#allocation2 + $0x18] sm:$0xff] %v187
    %192 = vst [vmem:[#allocation2 + $0x20] sm:$0xff] %v188
    %193 = vst [vmem:[#allocation2 + $0x28] sm:$0xff] %v189
    %198 = vrot.lane.b32.xlu0 %v187, 127
    %v199 = vpop.permute.xlu0 %198
    %200 = vrot.lane.b32.xlu0 %v188, 127
    %v201 = vpop.permute.xlu0 %200
    %202 = vrot.lane.b32.xlu0 %v189, 127
    %v203 = vpop.permute.xlu0 %202
    %204 = vrot.lane.b32.xlu0 %v190, 127
    %v205 = vpop.permute.xlu0 %204
    %v206 = vsel %vm50, %v199, %v201
    %v207 = vsel %vm50, %v201, %v203
    %v208 = vsel %vm50, %v203, %v205
    %212 = vst [vmem:[#allocation2 + $0x48] sm:$0xff] %v206
    %213 = vst [vmem:[#allocation2 + $0x50] sm:$0xff] %v207
    %214 = vst [vmem:[#allocation2 + $0x58] sm:$0xff] %v208
    %215 = vrot.lane.b32.xlu0 %v187, 126
    %v216 = vpop.permute.xlu0 %215
    %217 = vrot.lane.b32.xlu0 %v188, 126
    %v218 = vpop.permute.xlu0 %217
    %219 = vrot.lane.b32.xlu0 %v189, 126
    %v220 = vpop.permute.xlu0 %219
    %221 = vrot.lane.b32.xlu0 %v190, 126
    %v222 = vpop.permute.xlu0 %221
    %v223 = vsel %vm68, %v216, %v218
    %v224 = vsel %vm68, %v218, %v220
    %v225 = vsel %vm68, %v220, %v222
    %229 = vst [vmem:[#allocation2 + $0x78] sm:$0xff] %v223
    %230 = vst [vmem:[#allocation2 + $0x80] sm:$0xff] %v224
    %231 = vst [vmem:[#allocation2 + $0x88] sm:$0xff] %v225
    %232 = vrot.lane.b32.xlu0 %v187, 104
    %v233 = vpop.permute.xlu0 %232
    %234 = vrot.lane.b32.xlu0 %v188, 104
    %v235 = vpop.permute.xlu0 %234
    %236 = vrot.lane.b32.xlu0 %v189, 104
    %v237 = vpop.permute.xlu0 %236
    %238 = vrot.lane.b32.xlu0 %v190, 104
    %v239 = vpop.permute.xlu0 %238
    %v240 = vsel %vm86, %v233, %v235
    %v241 = vsel %vm86, %v235, %v237
    %v242 = vsel %vm86, %v237, %v239
    %246 = vst [vmem:[#allocation2 + $0xa8] sm:$0xff] %v240
    %247 = vst [vmem:[#allocation2 + $0xb0] sm:$0xff] %v241
    %248 = vst [vmem:[#allocation2 + $0xb8] sm:$0xff] %v242
    %249 = vrot.lane.b32.xlu0 %v187, 103
    %v250 = vpop.permute.xlu0 %249
    %251 = vrot.lane.b32.xlu0 %v188, 103
    %v252 = vpop.permute.xlu0 %251
    %253 = vrot.lane.b32.xlu0 %v189, 103
    %v254 = vpop.permute.xlu0 %253
    %255 = vrot.lane.b32.xlu0 %v190, 103
    %v256 = vpop.permute.xlu0 %255
    %v257 = vsel %vm104, %v250, %v252
    %v258 = vsel %vm104, %v252, %v254
    %v259 = vsel %vm104, %v254, %v256
    %263 = vst [vmem:[#allocation2 + $0xd8] sm:$0xff] %v257
    %264 = vst [vmem:[#allocation2 + $0xe0] sm:$0xff] %v258
    %265 = vst [vmem:[#allocation2 + $0xe8] sm:$0xff] %v259
    %266 = vrot.lane.b32.xlu0 %v187, 102
    %v267 = vpop.permute.xlu0 %266
    %268 = vrot.lane.b32.xlu0 %v188, 102
    %v269 = vpop.permute.xlu0 %268
    %270 = vrot.lane.b32.xlu0 %v189, 102
    %v271 = vpop.permute.xlu0 %270
    %272 = vrot.lane.b32.xlu0 %v190, 102
    %v273 = vpop.permute.xlu0 %272
    %v274 = vsel %vm122, %v267, %v269
    %v275 = vsel %vm122, %v269, %v271
    %v276 = vsel %vm122, %v271, %v273
    %280 = vst [vmem:[#allocation2 + $0x108] sm:$0xff] %v274
    %281 = vst [vmem:[#allocation2 + $0x110] sm:$0xff] %v275
    %282 = vst [vmem:[#allocation2 + $0x118] sm:$0xff] %v276
    %283 = vrot.lane.b32.xlu0 %v187, 80
    %v284 = vpop.permute.xlu0 %283
    %285 = vrot.lane.b32.xlu0 %v188, 80
    %v286 = vpop.permute.xlu0 %285
    %287 = vrot.lane.b32.xlu0 %v189, 80
    %v288 = vpop.permute.xlu0 %287
    %289 = vrot.lane.b32.xlu0 %v190, 80
    %v290 = vpop.permute.xlu0 %289
    %v291 = vsel %vm140, %v284, %v286
    %v292 = vsel %vm140, %v286, %v288
    %v293 = vsel %vm140, %v288, %v290
    %297 = vst [vmem:[#allocation2 + $0x138] sm:$0xff] %v291
    %298 = vst [vmem:[#allocation2 + $0x140] sm:$0xff] %v292
    %299 = vst [vmem:[#allocation2 + $0x148] sm:$0xff] %v293
    %300 = vrot.lane.b32.xlu0 %v187, 79
    %v301 = vpop.permute.xlu0 %300
    %302 = vrot.lane.b32.xlu0 %v188, 79
    %v303 = vpop.permute.xlu0 %302
    %304 = vrot.lane.b32.xlu0 %v189, 79
    %v305 = vpop.permute.xlu0 %304
    %306 = vrot.lane.b32.xlu0 %v190, 79
    %v307 = vpop.permute.xlu0 %306
    %v308 = vsel %vm158, %v301, %v303
    %v309 = vsel %vm158, %v303, %v305
    %v310 = vsel %vm158, %v305, %v307
    %314 = vst [vmem:[#allocation2 + $0x168] sm:$0xff] %v308
    %315 = vst [vmem:[#allocation2 + $0x170] sm:$0xff] %v309
    %316 = vst [vmem:[#allocation2 + $0x178] sm:$0xff] %v310
    %317 = vrot.lane.b32.xlu0 %v187, 78
    %v318 = vpop.permute.xlu0 %317
    %319 = vrot.lane.b32.xlu0 %v188, 78
    %v320 = vpop.permute.xlu0 %319
    %321 = vrot.lane.b32.xlu0 %v189, 78
    %v322 = vpop.permute.xlu0 %321
    %323 = vrot.lane.b32.xlu0 %v190, 78
    %v324 = vpop.permute.xlu0 %323
    %v325 = vsel %vm176, %v318, %v320
    %v326 = vsel %vm176, %v320, %v322
    %v327 = vsel %vm176, %v322, %v324
    %331 = vst [vmem:[#allocation2 + $0x198] sm:$0xff] %v325
    %332 = vst [vmem:[#allocation2 + $0x1a0] sm:$0xff] %v326
    %333 = vst [vmem:[#allocation2 + $0x1a8] sm:$0xff] %v327
    %v334 = vld [vmem:[%s1] sm:$0xff]
    %v335 = vld [vmem:[#allocation2] sm:$0xff]
    %v336 = vld [vmem:[#allocation2 + $0x8] sm:$0xff]
    %v337 = vld [vmem:[#allocation2 + $0x10] sm:$0xff]
    %v338 = vld [vmem:[#allocation2 + $0x18] sm:$0xff]
    %v339 = vld [vmem:[#allocation2 + $0x20] sm:$0xff]
    %v340 = vld [vmem:[#allocation2 + $0x28] sm:$0xff]
    %v341 = vld [vmem:[#allocation2 + $0x30] sm:$0xff]
    %v342 = vld [vmem:[#allocation2 + $0x38] sm:$0xff]
    %v343 = vld [vmem:[#allocation2 + $0x40] sm:$0xff]
    %v344 = vld [vmem:[#allocation2 + $0x48] sm:$0xff]
    %v345 = vld [vmem:[#allocation2 + $0x50] sm:$0xff]
    %v346 = vld [vmem:[#allocation2 + $0x58] sm:$0xff]
    %v347 = vld [vmem:[#allocation2 + $0x60] sm:$0xff]
    %v348 = vld [vmem:[#allocation2 + $0x68] sm:$0xff]
    %v349 = vld [vmem:[#allocation2 + $0x70] sm:$0xff]
    %v350 = vld [vmem:[#allocation2 + $0x78] sm:$0xff]
    %v351 = vld [vmem:[#allocation2 + $0x80] sm:$0xff]
    %v352 = vld [vmem:[#allocation2 + $0x88] sm:$0xff]
    %v353 = vld [vmem:[#allocation2 + $0x90] sm:$0xff]
    %v354 = vld [vmem:[#allocation2 + $0x98] sm:$0xff]
    %v355 = vld [vmem:[#allocation2 + $0xa0] sm:$0xff]
    %v356 = vld [vmem:[#allocation2 + $0xa8] sm:$0xff]
    %v357 = vld [vmem:[#allocation2 + $0xb0] sm:$0xff]
    %v358 = vld [vmem:[#allocation2 + $0xb8] sm:$0xff]
    %v359 = vld [vmem:[#allocation2 + $0xc0] sm:$0xff]
    %v360 = vld [vmem:[#allocation2 + $0xc8] sm:$0xff]
    %v361 = vld [vmem:[#allocation2 + $0xd0] sm:$0xff]
    %v362 = vld [vmem:[#allocation2 + $0xd8] sm:$0xff]
    %v363 = vld [vmem:[#allocation2 + $0xe0] sm:$0xff]
    %v364 = vld [vmem:[#allocation2 + $0xe8] sm:$0xff]
    %v365 = vld [vmem:[#allocation2 + $0xf0] sm:$0xff]
    %v366 = vld [vmem:[#allocation2 + $0xf8] sm:$0xff]
    %v367 = vld [vmem:[#allocation2 + $0x100] sm:$0xff]
    %v368 = vld [vmem:[#allocation2 + $0x108] sm:$0xff]
    %v369 = vld [vmem:[#allocation2 + $0x110] sm:$0xff]
    %v370 = vld [vmem:[#allocation2 + $0x118] sm:$0xff]
    %v371 = vld [vmem:[#allocation2 + $0x120] sm:$0xff]
    %v372 = vld [vmem:[#allocation2 + $0x128] sm:$0xff]
    %v373 = vld [vmem:[#allocation2 + $0x130] sm:$0xff]
    %v374 = vld [vmem:[#allocation2 + $0x138] sm:$0xff]
    %v375 = vld [vmem:[#allocation2 + $0x140] sm:$0xff]
    %v376 = vld [vmem:[#allocation2 + $0x148] sm:$0xff]
    %v377 = vld [vmem:[#allocation2 + $0x150] sm:$0xff]
    %v378 = vld [vmem:[#allocation2 + $0x158] sm:$0xff]
    %v379 = vld [vmem:[#allocation2 + $0x160] sm:$0xff]
    %v380 = vld [vmem:[#allocation2 + $0x168] sm:$0xff]
    %v381 = vld [vmem:[#allocation2 + $0x170] sm:$0xff]
    %v382 = vld [vmem:[#allocation2 + $0x178] sm:$0xff]
    %v383 = vld [vmem:[#allocation2 + $0x180] sm:$0xff]
    %v384 = vld [vmem:[#allocation2 + $0x188] sm:$0xff]
    %v385 = vld [vmem:[#allocation2 + $0x190] sm:$0xff]
    %v386 = vld [vmem:[#allocation2 + $0x198] sm:$0xff]
    %v387 = vld [vmem:[#allocation2 + $0x1a0] sm:$0xff]
    %v388 = vld [vmem:[#allocation2 + $0x1a8] sm:$0xff]
    %v389 = vld [vmem:[%s2] sm:$0xff]
    %391 = vset.pattern.permute.xlu0 0
    %392 = vperm.xlu0 %391, %v389
    %v393 = vpop.permute.xlu0 %392
    %vm395 = vcmask 588800
    %v397 = vsel %vm395, %v334, 0
    %399 = vmatpush.msra.mxu0 0.0
    %400 = vmatpush.msra.mxu0 0.0
    %401 = vmatpush.msra.mxu0 0.0
    %402 = vmatpush.msra.mxu0 0.0
    %403 = vmatpush.msra.mxu0 0.0
    %404 = vmatpush.msra.mxu0 0.0
    %405 = vmatpush.msra.mxu0 0.0
    %406 = vmatpush.msra.mxu0 %v383
    %407 = vmatpush.msra.mxu0 %v377
    %408 = vmatpush.msra.mxu0 %v371
    %409 = vmatpush.msra.mxu0 %v365
    %410 = vmatpush.msra.mxu0 %v359
    %411 = vmatpush.msra.mxu0 %v353
    %412 = vmatpush.msra.mxu0 %v347
    %413 = vmatpush.msra.mxu0 %v341
    %414 = vmatpush.msra.mxu0 %v335
    %415 = vmatmul.f32.gmra.mxu0 %v397
    %v416 = vpop.f32.mrf.mxu0
    %v417 = vadd.f32 %v393, %v416
    %418 = vdwg.mxu0
    %419 = vmatpush.msra.mxu0 0.0
    %420 = vmatpush.msra.mxu0 0.0
    %421 = vmatpush.msra.mxu0 0.0
    %422 = vmatpush.msra.mxu0 0.0
    %423 = vmatpush.msra.mxu0 0.0
    %424 = vmatpush.msra.mxu0 0.0
    %425 = vmatpush.msra.mxu0 0.0
    %426 = vmatpush.msra.mxu0 %v384
    %427 = vmatpush.msra.mxu0 %v378
    %428 = vmatpush.msra.mxu0 %v372
    %429 = vmatpush.msra.mxu0 %v366
    %430 = vmatpush.msra.mxu0 %v360
    %431 = vmatpush.msra.mxu0 %v354
    %432 = vmatpush.msra.mxu0 %v348
    %433 = vmatpush.msra.mxu0 %v342
    %434 = vmatpush.msra.mxu0 %v336
    %435 = vmatmul.f32.gmra.mxu0 %v397
    %v436 = vpop.f32.mrf.mxu0
    %v437 = vadd.f32 %v393, %v436
    %438 = vdwg.mxu0
    %439 = vmatpush.msra.mxu0 0.0
    %440 = vmatpush.msra.mxu0 0.0
    %441 = vmatpush.msra.mxu0 0.0
    %442 = vmatpush.msra.mxu0 0.0
    %443 = vmatpush.msra.mxu0 0.0
    %444 = vmatpush.msra.mxu0 0.0
    %445 = vmatpush.msra.mxu0 0.0
    %446 = vmatpush.msra.mxu0 %v385
    %447 = vmatpush.msra.mxu0 %v379
    %448 = vmatpush.msra.mxu0 %v373
    %449 = vmatpush.msra.mxu0 %v367
    %450 = vmatpush.msra.mxu0 %v361
    %451 = vmatpush.msra.mxu0 %v355
    %452 = vmatpush.msra.mxu0 %v349
    %453 = vmatpush.msra.mxu0 %v343
    %454 = vmatpush.msra.mxu0 %v337
    %455 = vmatmul.f32.gmra.mxu0 %v397
    %v456 = vpop.f32.mrf.mxu0
    %v457 = vadd.f32 %v393, %v456
    %458 = vdwg.mxu0
    %459 = vmatpush.msra.mxu0 0.0
    %460 = vmatpush.msra.mxu0 0.0
    %461 = vmatpush.msra.mxu0 0.0
    %462 = vmatpush.msra.mxu0 0.0
    %463 = vmatpush.msra.mxu0 0.0
    %464 = vmatpush.msra.mxu0 0.0
    %465 = vmatpush.msra.mxu0 0.0
    %466 = vmatpush.msra.mxu0 %v386
    %467 = vmatpush.msra.mxu0 %v380
    %468 = vmatpush.msra.mxu0 %v374
    %469 = vmatpush.msra.mxu0 %v368
    %470 = vmatpush.msra.mxu0 %v362
    %471 = vmatpush.msra.mxu0 %v356
    %472 = vmatpush.msra.mxu0 %v350
    %473 = vmatpush.msra.mxu0 %v344
    %474 = vmatpush.msra.mxu0 %v338
    %475 = vmatmul.f32.gmra.mxu0 %v397
    %v476 = vpop.f32.mrf.mxu0
    %v477 = vadd.f32 %v393, %v476
    %478 = vdwg.mxu0
    %479 = vmatpush.msra.mxu0 0.0
    %480 = vmatpush.msra.mxu0 0.0
    %481 = vmatpush.msra.mxu0 0.0
    %482 = vmatpush.msra.mxu0 0.0
    %483 = vmatpush.msra.mxu0 0.0
    %484 = vmatpush.msra.mxu0 0.0
    %485 = vmatpush.msra.mxu0 0.0
    %486 = vmatpush.msra.mxu0 %v387
    %487 = vmatpush.msra.mxu0 %v381
    %488 = vmatpush.msra.mxu0 %v375
    %489 = vmatpush.msra.mxu0 %v369
    %490 = vmatpush.msra.mxu0 %v363
    %491 = vmatpush.msra.mxu0 %v357
    %492 = vmatpush.msra.mxu0 %v351
    %493 = vmatpush.msra.mxu0 %v345
    %494 = vmatpush.msra.mxu0 %v339
    %495 = vmatmul.f32.gmra.mxu0 %v397
    %v496 = vpop.f32.mrf.mxu0
    %v497 = vadd.f32 %v393, %v496
    %498 = vdwg.mxu0
    %499 = vmatpush.msra.mxu0 0.0
    %500 = vmatpush.msra.mxu0 0.0
    %501 = vmatpush.msra.mxu0 0.0
    %502 = vmatpush.msra.mxu0 0.0
    %503 = vmatpush.msra.mxu0 0.0
    %504 = vmatpush.msra.mxu0 0.0
    %505 = vmatpush.msra.mxu0 0.0
    %506 = vmatpush.msra.mxu0 %v388
    %507 = vmatpush.msra.mxu0 %v382
    %508 = vmatpush.msra.mxu0 %v376
    %509 = vmatpush.msra.mxu0 %v370
    %510 = vmatpush.msra.mxu0 %v364
    %511 = vmatpush.msra.mxu0 %v358
    %512 = vmatpush.msra.mxu0 %v352
    %513 = vmatpush.msra.mxu0 %v346
    %514 = vmatpush.msra.mxu0 %v340
    %515 = vmatmul.f32.gmra.mxu0 %v397
    %v516 = vpop.f32.mrf.mxu0
    %v517 = vadd.f32 %v393, %v516
    %518 = vdwg.mxu0
    %519 = vst [vmem:[#allocation6] sm:$0xff] %v417
    %520 = vst [vmem:[#allocation6 + $0x8] sm:$0xff] %v437
    %521 = vst [vmem:[#allocation6 + $0x10] sm:$0xff] %v457
    %s522 = scalar_lea.vmem [#allocation6], 24
    %523 = vst [vmem:[%s522] sm:$0xff] %v477
    %524 = vst [vmem:[%s522 + $0x8] sm:$0xff] %v497
    %525 = vst [vmem:[%s522 + $0x10] sm:$0xff] %v517
    // Predicated region
    $region18: #{tpu_custom_call.1} parent=1 // pred_check
      _
    $region19: #{tpu_custom_call.1} parent=1 // pred_check_branch
      %527 = sbr.rel (0) target = $region21
    $region20: #{tpu_custom_call.1} parent=1 // pred_region
      %529 = vsyncadd [#allocation5], 0
      %s530 = sshll.u32 [#allocation6], 4
      %s531 = int_to_ptr.vmem [resolvable:$true] %s530
      %s532 = sshll.u32 %s3, 4
      %s533 = int_to_ptr.hbm [resolvable:$true] %s532
      %538 = dma.vmem_to_hbm [thread:$0]  %s531, 768, %s533, [#allocation5], 384, 384, 24
    $region21: #{tpu_custom_call.1} parent=1 // pred_fallthru
      _
    // Predicated region
    $region22: #{tpu_custom_call.1} parent=1 // pred_check
      _
    $region23: #{tpu_custom_call.1} parent=1 // pred_check_branch
      %540 = sbr.rel (0) target = $region25
    $region24: #{tpu_custom_call.1} parent=1 // pred_region
      %542 = dma.done [#allocation5], 768
    $region25: #{tpu_custom_call.1} parent=1 // pred_fallthru
      _
    %543 = vsyncpa [#allocation4], 1
    %544 = vsyncpa [#allocation5], 1

</llo_original>
